<compile_context>
chip_gen: v7x
topology: tpu7x:2x2x1
jax: 0.10.0
libtpu: 0.0.40
codegen_flags: <defaults>
</compile_context>

<pallas_src>
import math

import jax
import jax.numpy as jnp
from jax.experimental import pallas as pl
from jax.experimental.pallas import tpu as pltpu

K_NEIGHBOURS = 8
F_RAW = 10    # 6 node features + 2 depot coords + 2 bias-indicator columns
F_PAD = 16    # contraction dim padded to a sublane multiple


# ----------------------------------------------------------------------------
# Pallas kernel: transposed fused linear,  o (D, TM) = w (D, F) @ x (F, TM).
# M (rows) rides the lane axis -> lane-dense input and output tiles.
# Bias is folded into `w` via indicator feature columns, so only 2 operands.
# ----------------------------------------------------------------------------
def _matmul_t_kernel(w_ref, x_ref, o_ref):
    o_ref[...] = jnp.dot(w_ref[...], x_ref[...],
                         preferred_element_type=jnp.float32)


def _round_up(x, m):
    return (x + m - 1) // m * m


def _pick_tile(m, tm_cap):
    """Lane-axis tile (number of stacked rows per grid step).

    * single grid step for small problems (per-step cost ~0.35us dominates;
      v5e/v6e have one TensorCore so extra steps buy nothing),
    * a 2-way split only once every step carries >= 512 real rows (so a v7x
      chip can shard the "parallel" axis over its 2 TensorCores),
    * capped at tm_cap so double-buffered VMEM stays small.
    """
    m128 = _round_up(max(m, 1), 128)
    if m128 > tm_cap:
        return tm_cap
    if m >= 1024:
        return max(128, _round_up(m128 // 2, 128))
    return m128


def fused_embed_matmul(w_t, feat_t, *, tm_cap=8192):
    """w_t: (D, F) @ feat_t: (F, M) -> (D, M), tiled along the M (lane) axis."""
    d, f = w_t.shape
    f2, m = feat_t.shape
    assert f == f2
    tm = _pick_tile(m, tm_cap)
    m_pad = _round_up(m, tm)
    if m_pad != m:
        # Padded columns are all-zero features (both indicators 0) -> output 0;
        # they are sliced off below, no masking needed.
        feat_t = jnp.pad(feat_t, ((0, 0), (0, m_pad - m)))

    flops = 2 * d * f * m_pad
    bytes_accessed = 4 * (d * f + f * m_pad + d * m_pad)

    out = pl.pallas_call(
        _matmul_t_kernel,
        out_shape=jax.ShapeDtypeStruct((d, m_pad), jnp.float32),
        grid_spec=pltpu.PrefetchScalarGridSpec(
            num_scalar_prefetch=0,
            grid=(m_pad // tm,),
            in_specs=[
                pl.BlockSpec((d, f), lambda i: (0, 0)),    # resident weight
                pl.BlockSpec((f, tm), lambda i: (0, i)),   # lane-dense input
            ],
            out_specs=pl.BlockSpec((d, tm), lambda i: (0, i)),  # lane-dense out
        ),
        compiler_params=pltpu.CompilerParams(
            dimension_semantics=("parallel",)),
        cost_estimate=pl.CostEstimate(flops=flops, transcendentals=0,
                                      bytes_accessed=bytes_accessed),
    )(w_t, feat_t)
    return out[:, :m]


# ----------------------------------------------------------------------------
# k-NN selection (plain JAX glue; data dependent).
# ----------------------------------------------------------------------------
def _knn(x2, k):
    # Squared distances are monotone in the true distance -> same neighbour
    # set, no sqrt, and top_k avoids materializing/sorting full rows.
    # TODO(synk): torch .sort() tie-breaking can differ from top_k on exact
    #             distance ties (measure-zero for float inputs).
    d2 = jnp.sum((x2[:, :, None, :] - x2[:, None, :, :]) ** 2, axis=-1)
    _, idx = jax.lax.top_k(-d2, k)
    return idx


# ----------------------------------------------------------------------------
# Forward pass (matches CCN3.forward outputs)
# ----------------------------------------------------------------------------
def ccn3_forward(params, loc, deadline, depot, *, tm_cap=8192):
    """Returns (h, h.mean(axis=1)), exactly like the PyTorch module."""
    b, n, _ = loc.shape
    nd = depot.shape[1]
    d = params["W_init"].shape[1]
    k = K_NEIGHBOURS

    # x = cat(loc, deadline[:, :, None]) -> (B, N, 3)
    x = jnp.concatenate([loc, deadline[:, :, None]], axis=2)

    neighbors = _knn(x[:, :, :2], k)                                # (B, N, K)

    # Reference quirk (intentional, do NOT "fix"): x[:, neighbors][0] gathers
    # neighbour coordinates from batch 0 only.  Only the SUM over neighbours
    # is needed after the algebraic fold.
    nbr_sum = x[0][neighbors].sum(axis=2)                           # (B, N, 3)

    # --- fold CCN layer 1 into a single matmul (f32) ---
    w_fused = jnp.concatenate(
        [(params["W_init"] - k * params["W_ne"]) @ params["W_fin"],
         params["W_ne"] @ params["W_fin"]], axis=0)                 # (6, D)
    b_fused = ((params["b_init"] + k * params["b_ne"]) @ params["W_fin"]
               + (k + 1) * params["b_fin"])                         # (D,)

    # --- fuse depot embedding + both biases into one weight ---
    # feature layout per stacked row (F_RAW=10, zero padded to F_PAD=16):
    #   [ x(3) | nbr_sum(3) | depot_xy(2) | is_node | is_depot ]
    w_all = jnp.concatenate(
        [w_fused,                                   # rows 0-5
         params["W_dep"],                           # rows 6-7
         b_fused[None, :],                          # row 8 (node bias)
         params["b_dep"][None, :],                  # row 9 (depot bias)
         jnp.zeros((F_PAD - F_RAW, d), jnp.float32)], axis=0)       # (16, D)

    zeros = lambda *s: jnp.zeros(s, jnp.float32)
    ones = lambda *s: jnp.ones(s, jnp.float32)
    node_feat = jnp.concatenate(
        [x, nbr_sum, zeros(b, n, 2), ones(b, n, 1), zeros(b, n, 1),
         zeros(b, n, F_PAD - F_RAW)], axis=-1)                      # (B, N, 16)
    depot_feat = jnp.concatenate(
        [zeros(b, nd, 6), depot, zeros(b, nd, 1), ones(b, nd, 1),
         zeros(b, nd, F_PAD - F_RAW)], axis=-1)                     # (B, nd, 16)

    # Depot rows first per batch -> kernel output is already ordered like h.
    feat = jnp.concatenate([depot_feat, node_feat], axis=1)         # (B, nd+N, 16)
    m = b * (nd + n)
    feat_t = feat.reshape(m, F_PAD).T                               # (16, M)

    out_t = fused_embed_matmul(w_all.T, feat_t, tm_cap=tm_cap)      # (D, M)

    h = out_t.T.reshape(b, nd + n, d)                               # (B, 1+N, D)
    # NOTE: the module's layer-2 stack does not affect the returned outputs
    # and is intentionally not computed (dead code in the reference).
    return h, h.mean(axis=1)


# ----------------------------------------------------------------------------
# Pure-JAX reference (unfolded, mirrors the PyTorch forward) for correctness.
# ----------------------------------------------------------------------------
def ccn3_reference(params, loc, deadline, depot):
    x = jnp.concatenate([loc, deadline[:, :, None]], axis=2)
    f0 = x @ params["W_init"] + params["b_init"]
    neighbors = _knn(x[:, :, :2], K_NEIGHBOURS)
    nbr = x[0][neighbors]                       # batch-0 gather quirk
    delta = nbr - x[:, :, None, :]
    nde = delta @ params["W_ne"] + params["b_ne"]
    concat = jnp.concatenate([f0[:, :, None, :], nde], axis=2)
    f1 = (concat @ params["W_fin"] + params["b_fin"]).sum(axis=2)
    depot_e = depot @ params["W_dep"] + params["b_dep"]
    h = jnp.concatenate([depot_e, f1], axis=-2)
    return h, h.mean(axis=1)


# ----------------------------------------------------------------------------
# Deterministic parameter init (PyTorch nn.Linear default: U(-1/sqrt(in), ..))
# ----------------------------------------------------------------------------
def init_linear(key, fan_in, fan_out):
    kw, kb = jax.random.split(key)
    bound = 1.0 / math.sqrt(fan_in)
    w = jax.random.uniform(kw, (fan_in, fan_out), jnp.float32, -bound, bound)
    b = jax.random.uniform(kb, (fan_out,), jnp.float32, -bound, bound)
    return w, b


def make_params(key, node_dim=3, embed_dim=32):
    keys = jax.random.split(key, 8)
    p = {}
    p["W_init"], p["b_init"] = init_linear(keys[0], node_dim, embed_dim)
    p["W_ne"], p["b_ne"] = init_linear(keys[1], node_dim, embed_dim)
    p["W_dep"], p["b_dep"] = init_linear(keys[2], 2, embed_dim)
    p["W_fin"], p["b_fin"] = init_linear(keys[3], embed_dim, embed_dim)
    # Layer-2 weights exist in the module but do not affect its outputs.
    p["W_init2"], p["b_init2"] = init_linear(keys[4], embed_dim, embed_dim)
    p["W_ne2"], p["b_ne2"] = init_linear(keys[5], embed_dim, embed_dim)
    p["W_fin2"], p["b_fin2"] = init_linear(keys[6], embed_dim, embed_dim)
    return p


if __name__ == "__main__":
    B, N, EMBED_DIM = 2, 16, 32           # small shapes; N >= 8 needed for k-NN

    key = jax.random.PRNGKey(0)
    k_loc, k_dl, k_dep, k_params = jax.random.split(key, 4)

    loc = jax.random.uniform(k_loc, (B, N, 2), jnp.float32)        # X['loc']
    deadline = jax.random.uniform(k_dl, (B, N), jnp.float32)       # X['deadline']
    depot = jax.random.uniform(k_dep, (B, 1, 2), jnp.float32)      # X['depot']

    params = make_params(k_params, node_dim=3, embed_dim=EMBED_DIM)

    fwd = jax.jit(lambda p, a, dl, dp: ccn3_forward(p, a, dl, dp))
    h, h_mean = fwd(params, loc, deadline, depot)
    jax.block_until_ready((h, h_mean))

    h_ref, h_mean_ref = ccn3_reference(params, loc, deadline, depot)
    assert h.shape == (B, N + 1, EMBED_DIM)
    assert h_mean.shape == (B, EMBED_DIM)
    assert jnp.allclose(h, h_ref, rtol=1e-4, atol=1e-4)
    assert jnp.allclose(h_mean, h_mean_ref, rtol=1e-4, atol=1e-4)

    print("KERNEL_OK")
</pallas_src>

<mosaic_0001>
module attributes {stable_mosaic.version = 11 : i64} {
  func.func @_matmul_t_kernel(%arg0: i32, %arg1: memref<32x16xf32, #tpu.memory_space<vmem>>, %arg2: memref<16x128xf32, #tpu.memory_space<vmem>>, %arg3: memref<32x128xf32, #tpu.memory_space<vmem>>) attributes {dimension_semantics = [#tpu.dimension_semantics<parallel>], iteration_bounds = array<i64: 1>, scalar_prefetch = 0 : i64, scratch_operands = 0 : i64, tpu.core_type = #tpu.core_type<tc>, window_params = [{pipeline_mode = #tpu.pipeline_mode<synchronous>, transform_indices = @transform_0, window_bounds = array<i64: 32, 16>}, {transform_indices = @transform_1, window_bounds = array<i64: 16, 128>}, {transform_indices = @transform_2, window_bounds = array<i64: 32, 128>}]} {
    %c0 = arith.constant 0 : index
    %c0_0 = arith.constant 0 : index
    %0 = vector.load %arg1[%c0, %c0_0] : memref<32x16xf32, #tpu.memory_space<vmem>>, vector<32x16xf32>
    %c0_1 = arith.constant 0 : index
    %c0_2 = arith.constant 0 : index
    %1 = vector.load %arg2[%c0_1, %c0_2] : memref<16x128xf32, #tpu.memory_space<vmem>>, vector<16x128xf32>
    %cst = arith.constant dense<0.000000e+00> : vector<32x128xf32>
    %2 = tpu.matmul %0, %1, %cst {dimension_numbers = #tpu.dot_dimension_numbers<[1], [0], [0], [1], [0, 0, 1, 1], [], []>} : vector<32x16xf32>, vector<16x128xf32>, vector<32x128xf32> -> vector<32x128xf32>
    %c0_3 = arith.constant 0 : index
    %c0_4 = arith.constant 0 : index
    %3 = vector.load %arg3[%c0_3, %c0_4] : memref<32x128xf32, #tpu.memory_space<vmem>>, vector<32x128xf32>
    tpu.vector_store %arg3[%c0_3, %c0_4], %2 {strides = array<i32>} : memref<32x128xf32, #tpu.memory_space<vmem>>, vector<32x128xf32>,
    return
  }
  func.func @transform_0(%arg0: i32) -> (i32, i32) {
    %c0_i32 = arith.constant 0 : i32
    %c0_i32_0 = arith.constant 0 : i32
    %c0_i32_1 = arith.constant 0 : i32
    return %c0_i32, %c0_i32_0 : i32, i32
  }
  func.func @transform_1(%arg0: i32) -> (i32, i32) {
    %c0_i32 = arith.constant 0 : i32
    %c0_i32_0 = arith.constant 0 : i32
    return %c0_i32, %arg0 : i32, i32
  }
  func.func @transform_2(%arg0: i32) -> (i32, i32) {
    %c0_i32 = arith.constant 0 : i32
    %c0_i32_0 = arith.constant 0 : i32
    return %c0_i32, %arg0 : i32, i32
  }
}

</mosaic_0001>

<llo_original>
// kernel: neg.1
$region0: #{neg.1}
  #allocation0 [shape = 's32[1]{0}', space=sflag, size = 0x4, scoped, tag = 'scoped memory for neg.1']
  %s0 = inlined_call_operand.vmem [shape: f32[2,16,16], index: 0, kind: input, shape index: {}]
  %s1 = inlined_call_operand.vmem [shape: f32[2,16,16], index: 1, kind: output, shape index: {}]
  %v2 = vld [vmem:[%s0] sm:$0xff]
  %3 = xla_tuple %v2
  %4 = xla_tuple %3
  %v5 = vxor.u32 %v2, 2147483648
  %6 = xla_tuple %v5
  %7 = vst [vmem:[%s1] sm:$0xff] %v5
  %s8 = scalar_lea.vmem %s0, 16
  %v9 = vld [vmem:[%s8] sm:$0xff]
  %10 = xla_tuple %v9
  %11 = xla_tuple %10
  %v12 = vxor.u32 %v9, 2147483648
  %13 = xla_tuple %v12
  %s14 = scalar_lea.vmem %s1, 16
  %15 = vst [vmem:[%s14] sm:$0xff] %v12
  %s16 = scalar_lea.vmem %s0, 8
  %v17 = vld [vmem:[%s16] sm:$0xff]
  %18 = xla_tuple %v17
  %19 = xla_tuple %18
  %v20 = vxor.u32 %v17, 2147483648
  %21 = xla_tuple %v20
  %s22 = scalar_lea.vmem %s1, 8
  %23 = vst [vmem:[%s22] sm:$0xff] %v20
  %s24 = scalar_lea.vmem %s0, 24
  %v25 = vld [vmem:[%s24] sm:$0xff]
  %26 = xla_tuple %v25
  %27 = xla_tuple %26
  %v28 = vxor.u32 %v25, 2147483648
  %29 = xla_tuple %v28
  %s30 = scalar_lea.vmem %s1, 24
  %31 = vst [vmem:[%s30] sm:$0xff] %v28

// kernel: _lambda_.1
$region0: #{_lambda_.1}
  #allocation0 [shape = 'u32[]', space=smem, size = 0x4, offset = 0x4, fixed_abs, tag = 'smem constant byte address 0x4 - core index']
  #allocation1 [shape = 'u32[144,128]{1,0:T(1,128)}', space=vmem, size = 0x12000, scoped, tag = 'internal scratch']
  %s0 = inlined_call_operand.vmem [shape: f32[32,16], index: 0, kind: input, shape index: {}]
  %s1 = inlined_call_operand.vmem [shape: f32[16,128], index: 1, kind: input, shape index: {}]
  %s2 = inlined_call_operand.vmem [shape: f32[32,128], index: 2, kind: output, shape index: {}]
  %s3 = sld [smem:[#allocation0]]
  $region18: #{_lambda_.1} parent=0
    _
  %s5 = ssub.s32 1, %s3
  %s6 = scalar_select 0, %s5, %s3
  // Predicated region
  $region2: #{_lambda_.1} parent=0 // pred_check
    _
  $region3: #{_lambda_.1} parent=0 // pred_check_branch
    %8 = sbr.rel (0) target = $region5
  $region4: #{_lambda_.1} parent=0 // pred_region
    _
  $region5: #{_lambda_.1} parent=0 // pred_fallthru
    _
  // Predicated region
  $region6: #{_lambda_.1} parent=0 // pred_check
    _
  $region7: #{_lambda_.1} parent=0 // pred_check_branch
    %10 = sbr.rel (0) target = $region9
  $region8: #{_lambda_.1} parent=0 // pred_region
    _
  $region9: #{_lambda_.1} parent=0 // pred_fallthru
    _
  %v11 = vld [vmem:[%s0] sm:$0xff]
  %v12 = vld [vmem:[%s0 + $0x8] sm:$0xff]
  %v13 = vld [vmem:[%s0 + $0x10] sm:$0xff]
  %v14 = vld [vmem:[%s0 + $0x18] sm:$0xff]
  %v15 = vld [vmem:[%s1] sm:$0xff]
  %v16 = vld [vmem:[%s1 + $0x8] sm:$0xff]
  %vm17 = vcmask 130048
  %v19 = vsel %vm17, %v11, 0
  %v22 = vsel %vm17, %v12, 0
  %v25 = vsel %vm17, %v13, 0
  %v28 = vsel %vm17, %v14, 0
  %30 = vmatprep.subr.mxu0 0.0
  %31 = vmatpush1.msra.mxu0 %v15
  %32 = vmatprep.subr.mxu0 0.0
  %33 = vmatpush1.msra.mxu0 %v16
  %34 = vmatprep.subr.mxu0 0.0
  %35 = vmatpush1.msra.mxu0 0.0
  %36 = vmatprep.subr.mxu0 0.0
  %37 = vmatpush1.msra.mxu0 0.0
  %38 = vmatprep.subr.mxu0 0.0
  %39 = vmatpush1.msra.mxu0 0.0
  %40 = vmatprep.subr.mxu0 0.0
  %41 = vmatpush1.msra.mxu0 0.0
  %42 = vmatprep.subr.mxu0 0.0
  %43 = vmatpush1.msra.mxu0 0.0
  %44 = vmatprep.subr.mxu0 0.0
  %45 = vmatpush1.msra.mxu0 0.0
  %46 = vmatprep.subr.mxu0 0.0
  %47 = vmatpush1.msra.mxu0 0.0
  %48 = vmatprep.subr.mxu0 0.0
  %49 = vmatpush1.msra.mxu0 0.0
  %50 = vmatprep.subr.mxu0 0.0
  %51 = vmatpush1.msra.mxu0 0.0
  %52 = vmatprep.subr.mxu0 0.0
  %53 = vmatpush1.msra.mxu0 0.0
  %54 = vmatprep.subr.mxu0 0.0
  %55 = vmatpush1.msra.mxu0 0.0
  %56 = vmatprep.subr.mxu0 0.0
  %57 = vmatpush1.msra.mxu0 0.0
  %58 = vmatprep.subr.mxu0 0.0
  %59 = vmatpush1.msra.mxu0 0.0
  %60 = vmatprep.subr.mxu0 0.0
  %61 = vmatpush1.msra.mxu0 0.0
  %62 = vmatprep.subr.mxu0 0.0
  %63 = vmatpush1.msra.mxu0 0.0
  %64 = vmatprep.subr.mxu0 0.0
  %65 = vmatpush1.msra.mxu0 0.0
  %66 = vmatprep.subr.mxu0 0.0
  %67 = vmatpush1.msra.mxu0 0.0
  %68 = vmatprep.subr.mxu0 0.0
  %69 = vmatpush1.msra.mxu0 0.0
  %70 = vmatprep.subr.mxu0 0.0
  %71 = vmatpush1.msra.mxu0 0.0
  %72 = vmatprep.subr.mxu0 0.0
  %73 = vmatpush1.msra.mxu0 0.0
  %74 = vmatprep.subr.mxu0 0.0
  %75 = vmatpush1.msra.mxu0 0.0
  %76 = vmatprep.subr.mxu0 0.0
  %77 = vmatpush1.msra.mxu0 0.0
  %78 = vmatprep.subr.mxu0 0.0
  %79 = vmatpush1.msra.mxu0 0.0
  %80 = vmatprep.subr.mxu0 0.0
  %81 = vmatpush1.msra.mxu0 0.0
  %82 = vmatprep.subr.mxu0 0.0
  %83 = vmatpush1.msra.mxu0 0.0
  %84 = vmatprep.subr.mxu0 0.0
  %85 = vmatpush1.msra.mxu0 0.0
  %86 = vmatprep.subr.mxu0 0.0
  %87 = vmatpush1.msra.mxu0 0.0
  %88 = vmatprep.subr.mxu0 0.0
  %89 = vmatpush1.msra.mxu0 0.0
  %90 = vmatprep.subr.mxu0 0.0
  %91 = vmatpush1.msra.mxu0 0.0
  %92 = vmatprep.subr.mxu0 0.0
  %93 = vmatpush1.msra.mxu0 0.0
  %94 = vmatprep.mubr.f32.mxu0 0.0
  %95 = vmatmul.mubr.f32.gmra.mrb[0].mxu0 %v19
  %v96 = vpop.f32.mrb[0].mxu0
  %v97 = vadd.f32 0.0, %v96
  %v98 = vpop.f32.mrb[0].mxu0
  %99 = vmatprep.mubr.f32.mxu0 0.0
  %100 = vmatmul.mubr.f32.gmra.mrb[0].mxu0 %v22
  %v101 = vpop.f32.mrb[0].mxu0
  %v102 = vadd.f32 0.0, %v101
  %v103 = vpop.f32.mrb[0].mxu0
  %104 = vmatprep.mubr.f32.mxu0 0.0
  %105 = vmatmul.mubr.f32.gmra.mrb[0].mxu0 %v25
  %v106 = vpop.f32.mrb[0].mxu0
  %v107 = vadd.f32 0.0, %v106
  %v108 = vpop.f32.mrb[0].mxu0
  %109 = vmatprep.mubr.f32.mxu0 0.0
  %110 = vmatmul.mubr.f32.gmra.mrb[0].mxu0 %v28
  %v111 = vpop.f32.mrb[0].mxu0
  %v112 = vadd.f32 0.0, %v111
  %v113 = vpop.f32.mrb[0].mxu0
  %114 = vdwg.mxu0
  %115 = vst [vmem:[%s2] sm:$0xff] %v97
  %116 = vst [vmem:[%s2 + $0x8] sm:$0xff] %v102
  %117 = vst [vmem:[%s2 + $0x10] sm:$0xff] %v107
  %118 = vst [vmem:[%s2 + $0x18] sm:$0xff] %v112
  // Predicated region
  $region10: #{_lambda_.1} parent=0 // pred_check
    _
  $region11: #{_lambda_.1} parent=0 // pred_check_branch
    %120 = sbr.rel (0) target = $region13
  $region12: #{_lambda_.1} parent=0 // pred_region
    _
  $region13: #{_lambda_.1} parent=0 // pred_fallthru
    _
  // Predicated region
  $region14: #{_lambda_.1} parent=0 // pred_check
    _
  $region15: #{_lambda_.1} parent=0 // pred_check_branch
    %122 = sbr.rel (0) target = $region17
  $region16: #{_lambda_.1} parent=0 // pred_region
    _
  $region17: #{_lambda_.1} parent=0 // pred_fallthru
    _

</llo_original>
